<compile_context>
chip_gen: v7x
topology: tpu7x:2x2x1
jax: 0.10.0
libtpu: 0.0.40
codegen_flags: <defaults>
</compile_context>

<pallas_src>
import functools

import jax
import jax.numpy as jnp
from jax import lax
from jax.experimental import pallas as pl
from jax.experimental.pallas import tpu as pltpu


def _round_up(x, m):
    return ((x + m - 1) // m) * m


def _pick_tile(size, pref, align=128):
    """Largest multiple of `align` that divides `size` (itself a multiple of
    `align`) and does not exceed max(pref, align)."""
    pref = max(pref, align)
    best = align
    for t in range(align, min(pref, size) + 1, align):
        if size % t == 0:
            best = t
    return best


def _device_profile():
    """Tile / VMEM defaults per TPU generation."""
    try:
        kind = jax.devices()[0].device_kind.lower()
    except Exception:  # pragma: no cover - defensive
        kind = ""
    if "v5" in kind or "v6" in kind:
        # 128 MiB VMEM: scale tiles up, amortize per-grid-step overhead.
        return dict(tm=512, tn=512, tk=1024, vmem=96 * 1024 * 1024)
    # v7x (64 MiB physical VMEM) and unknown chips: conservative budget.
    return dict(tm=256, tn=256, tk=512, vmem=48 * 1024 * 1024)


def prepare_scaled_linear_params(weight, bias, *, dtype=None):
    """Pad (out_feat, in_feat) weight and bias to multiples of 128 ONCE at
    parameter-init time (and optionally cast to the MXU operand dtype), so the
    per-call wrapper never jnp.pad's the largest operand."""
    n, k = weight.shape
    np_, kp_ = _round_up(n, 128), _round_up(k, 128)
    if (np_, kp_) != (n, k):
        weight = jnp.pad(weight, ((0, np_ - n), (0, kp_ - k)))
        bias = jnp.pad(bias, (0, np_ - n))
    if dtype is not None:
        weight = weight.astype(dtype)
    return weight, bias


# ---------------------------------------------------------------------------
# Kernels
# ---------------------------------------------------------------------------
def _scaled_linear_kernel_1k(x_ref, w_ref, b_ref, o_ref, *, scale):
    # Single K step: no accumulator scratch, write the output tile directly.
    acc = lax.dot_general(
        x_ref[...], w_ref[...],
        dimension_numbers=(((1,), (1,)), ((), ())),   # x @ W^T on the MXU
        preferred_element_type=jnp.float32,
    )
    o_ref[...] = (acc * scale + b_ref[...].astype(jnp.float32)).astype(o_ref.dtype)


def _scaled_linear_kernel_multi_k(x_ref, w_ref, b_ref, o_ref, acc_ref, *, scale):
    k = pl.program_id(2)
    part = lax.dot_general(
        x_ref[...], w_ref[...],
        dimension_numbers=(((1,), (1,)), ((), ())),
        preferred_element_type=jnp.float32,
    )

    @pl.when(k == 0)
    def _():
        acc_ref[...] = part          # first partial product, no zero-init store

    @pl.when(k > 0)
    def _():
        acc_ref[...] += part

    @pl.when(k == pl.num_programs(2) - 1)
    def _():
        out = acc_ref[...] * scale + b_ref[...].astype(jnp.float32)
        o_ref[...] = out.astype(o_ref.dtype)


# ---------------------------------------------------------------------------
# Wrapper
# ---------------------------------------------------------------------------
def scaled_linear(x, weight, bias, *, out_features=None, in_features=None,
                  mxu_dtype=None, tm=None, tn=None, tk=None,
                  vmem_limit_bytes=None):
    """x: (M, in_feat); weight: (out_feat, in_feat) possibly pre-padded via
    prepare_scaled_linear_params; bias: (out_feat,) padded to match weight."""
    prof = _device_profile()
    tm = prof["tm"] if tm is None else tm
    tn = prof["tn"] if tn is None else tn
    tk = prof["tk"] if tk is None else tk
    vmem_limit_bytes = prof["vmem"] if vmem_limit_bytes is None else vmem_limit_bytes

    M, Kx = x.shape
    Nw, Kw = weight.shape
    N = Nw if out_features is None else out_features
    K_logical = Kx if in_features is None else in_features
    scale = float((2.0 / K_logical) ** 0.5)   # uses the *unpadded* in_feat
    out_dtype = x.dtype

    # Optional bf16 MXU operands; accumulation stays f32, scale+bias applied
    # on the f32 accumulator so accuracy is preserved as far as possible.
    if mxu_dtype is not None:
        x = x.astype(mxu_dtype)
        weight = weight.astype(mxu_dtype)
    op_dtype = jnp.dtype(x.dtype)
    sub = 16 if op_dtype == jnp.dtype(jnp.bfloat16) else 8

    # Weight/bias padding (no-op if prepare_scaled_linear_params was used).
    Np, Kp = _round_up(Nw, 128), _round_up(Kw, 128)
    if (Np, Kp) != (Nw, Kw):
        weight = jnp.pad(weight, ((0, Np - Nw), (0, Kp - Kw)))
    if bias.shape[0] != Np:
        bias = jnp.pad(bias, (0, Np - bias.shape[0]))
    bias2d = bias.reshape(1, Np)
    assert Kx <= Kp, "activation in_feat exceeds (padded) weight in_feat"

    # Tile selection: lane-dense (multiples of 128) and dividing the padded dims.
    tm = min(tm, _round_up(M, sub))
    tn = _pick_tile(Np, tn, 128)
    tk = _pick_tile(Kp, tk, 128)
    Mp = _round_up(M, tm)

    # Give the second TensorCore work (v7x) when the parallel grid collapses.
    if Mp // tm == 1 and Np // tn == 1 and Np >= 256:
        tn = _pick_tile(Np, Np // 2, 128)

    # Only the cheap activation is padded per call.
    xp = x if (Mp == M and Kp == Kx) else jnp.pad(x, ((0, Mp - M), (0, Kp - Kx)))

    grid_m, grid_n, grid_k = Mp // tm, Np // tn, Kp // tk
    op_itemsize = op_dtype.itemsize
    out_itemsize = jnp.dtype(out_dtype).itemsize
    cost = pl.CostEstimate(
        flops=2 * Mp * Np * Kp,
        transcendentals=0,
        bytes_accessed=(Mp * Kp + Np * Kp) * op_itemsize
        + (Np + Mp * Np) * out_itemsize,
    )

    if grid_k == 1:
        # Fast path: whole K in one tile, no accumulator scratch.
        grid_spec = pltpu.PrefetchScalarGridSpec(
            num_scalar_prefetch=0,
            grid=(grid_m, grid_n),
            in_specs=[
                pl.BlockSpec((tm, Kp), lambda i, j: (i, 0)),   # x
                pl.BlockSpec((tn, Kp), lambda i, j: (j, 0)),   # weight (N, K)
                pl.BlockSpec((1, tn), lambda i, j: (0, j)),    # bias
            ],
            out_specs=pl.BlockSpec((tm, tn), lambda i, j: (i, j)),
        )
        kernel = functools.partial(_scaled_linear_kernel_1k, scale=scale)
        dim_sem = ("parallel", "parallel")
    else:
        if grid_k >= 4:
            # Deep K pipeline: extra buffering hides exposed HBM latency.
            x_spec = pl.BlockSpec((tm, tk), lambda i, j, k: (i, k),
                                  pipeline_mode=pl.Buffered(3))
            w_spec = pl.BlockSpec((tn, tk), lambda i, j, k: (j, k),
                                  pipeline_mode=pl.Buffered(3))
        else:
            x_spec = pl.BlockSpec((tm, tk), lambda i, j, k: (i, k))
            w_spec = pl.BlockSpec((tn, tk), lambda i, j, k: (j, k))
        grid_spec = pltpu.PrefetchScalarGridSpec(
            num_scalar_prefetch=0,
            grid=(grid_m, grid_n, grid_k),
            in_specs=[
                x_spec,
                w_spec,
                pl.BlockSpec((1, tn), lambda i, j, k: (0, j)),
            ],
            out_specs=pl.BlockSpec((tm, tn), lambda i, j, k: (i, j)),
            scratch_shapes=[pltpu.VMEM((tm, tn), jnp.float32)],
        )
        kernel = functools.partial(_scaled_linear_kernel_multi_k, scale=scale)
        dim_sem = ("parallel", "parallel", "arbitrary")

    out = pl.pallas_call(
        kernel,
        out_shape=jax.ShapeDtypeStruct((Mp, Np), out_dtype),
        grid_spec=grid_spec,
        compiler_params=pltpu.CompilerParams(
            dimension_semantics=dim_sem,
            vmem_limit_bytes=vmem_limit_bytes,
        ),
        cost_estimate=cost,
    )(xp, weight, bias2d)

    if Mp != M or Np != N:
        out = out[:M, :N]
    return out


# TODO(synk): for the full StyleGAN mapping network, fuse the 8 stacked
# ScaledLinear layers into one pallas_call with all 8 weight matrices and the
# (batch, 512) activation resident in VMEM, prefetching layer l+1's weights
# while computing layer l.

if __name__ == "__main__":
    key = jax.random.PRNGKey(0)
    kx, kw = jax.random.split(key)

    # --- Case 1: mapping-network-style layer, f32, single-K fast path -------
    batch, in_feat, out_feat = 8, 256, 256
    x = jax.random.normal(kx, (batch, in_feat), dtype=jnp.float32)
    # torch.nn.init.normal_(weight): standard normal, shape (out_feat, in_feat)
    weight = jax.random.normal(kw, (out_feat, in_feat), dtype=jnp.float32)
    # torch.nn.init.zeros_(bias)
    bias = jnp.zeros((out_feat,), dtype=jnp.float32)

    scale = (2.0 / in_feat) ** 0.5
    ref = (x * scale) @ weight.T + bias

    out = jax.block_until_ready(scaled_linear(x, weight, bias))
    assert out.shape == (batch, out_feat)
    assert jnp.allclose(out, ref, atol=1e-4, rtol=1e-4), "fast-path mismatch"

    # --- Case 2: force the multi-K accumulator path (tk=128 -> 2 K-steps) ---
    out_mk = jax.block_until_ready(scaled_linear(x, weight, bias, tk=128))
    assert jnp.allclose(out_mk, ref, atol=1e-4, rtol=1e-4), "multi-K mismatch"

    # --- Case 3: bf16 MXU operands with f32 accumulation (relaxed tol) ------
    out_bf = jax.block_until_ready(
        scaled_linear(x, weight, bias, mxu_dtype=jnp.bfloat16))
    assert out_bf.dtype == x.dtype
    assert jnp.allclose(out_bf, ref, atol=1e-1, rtol=5e-2), "bf16 mismatch"

    # --- Case 4: ragged shapes, params padded ONCE at init time -------------
    batch2, in2, out2 = 5, 96, 80
    x2 = jax.random.normal(kx, (batch2, in2), dtype=jnp.float32)
    w2 = jax.random.normal(kw, (out2, in2), dtype=jnp.float32)
    b2 = jax.random.normal(key, (out2,), dtype=jnp.float32)
    w2p, b2p = prepare_scaled_linear_params(w2, b2)
    out2_ = jax.block_until_ready(
        scaled_linear(x2, w2p, b2p, out_features=out2, in_features=in2))
    ref2 = (x2 * (2.0 / in2) ** 0.5) @ w2.T + b2
    assert out2_.shape == (batch2, out2)
    assert jnp.allclose(out2_, ref2, atol=1e-4, rtol=1e-4), "ragged mismatch"

    print("KERNEL_OK")
</pallas_src>

<mosaic_0001>
module attributes {stable_mosaic.version = 11 : i64} {
  func.func @_scaled_linear_kernel_1k(%arg0: i32, %arg1: i32, %arg2: memref<8x256xf32, #tpu.memory_space<vmem>>, %arg3: memref<128x256xf32, #tpu.memory_space<vmem>>, %arg4: memref<1x128xf32, #tpu.memory_space<vmem>>, %arg5: memref<8x128xf32, #tpu.memory_space<vmem>>) attributes {dimension_semantics = [#tpu.dimension_semantics<parallel>, #tpu.dimension_semantics<parallel>], iteration_bounds = array<i64: 1, 2>, scalar_prefetch = 0 : i64, scratch_operands = 0 : i64, tpu.core_type = #tpu.core_type<tc>, window_params = [{transform_indices = @transform_0, window_bounds = array<i64: 8, 256>}, {transform_indices = @transform_1, window_bounds = array<i64: 128, 256>}, {transform_indices = @transform_2, window_bounds = array<i64: 1, 128>}, {transform_indices = @transform_3, window_bounds = array<i64: 8, 128>}]} {
    %c0 = arith.constant 0 : index
    %c0_0 = arith.constant 0 : index
    %0 = vector.load %arg2[%c0, %c0_0] : memref<8x256xf32, #tpu.memory_space<vmem>>, vector<8x256xf32>
    %c0_1 = arith.constant 0 : index
    %c0_2 = arith.constant 0 : index
    %1 = vector.load %arg3[%c0_1, %c0_2] : memref<128x256xf32, #tpu.memory_space<vmem>>, vector<128x256xf32>
    %cst = arith.constant dense<0.000000e+00> : vector<8x128xf32>
    %2 = tpu.matmul %0, %1, %cst {dimension_numbers = #tpu.dot_dimension_numbers<[1], [1], [0], [0], [0, 0, 1, 0], [], []>} : vector<8x256xf32>, vector<128x256xf32>, vector<8x128xf32> -> vector<8x128xf32>
    %cst_3 = arith.constant 0.0883883461 : f32
    %3 = vector.broadcast %cst_3 : f32 to vector<8x128xf32>
    %4 = arith.mulf %2, %3 : vector<8x128xf32>
    %c0_4 = arith.constant 0 : index
    %c0_5 = arith.constant 0 : index
    %5 = vector.load %arg4[%c0_4, %c0_5] : memref<1x128xf32, #tpu.memory_space<vmem>>, vector<1x128xf32>
    %6 = vector.broadcast %5 : vector<1x128xf32> to vector<8x128xf32>
    %7 = arith.addf %4, %6 : vector<8x128xf32>
    %c0_6 = arith.constant 0 : index
    %c0_7 = arith.constant 0 : index
    %8 = vector.load %arg5[%c0_6, %c0_7] : memref<8x128xf32, #tpu.memory_space<vmem>>, vector<8x128xf32>
    tpu.vector_store %arg5[%c0_6, %c0_7], %7 {strides = array<i32>} : memref<8x128xf32, #tpu.memory_space<vmem>>, vector<8x128xf32>,
    return
  }
  func.func @transform_0(%arg0: i32, %arg1: i32) -> (i32, i32) {
    %c0_i32 = arith.constant 0 : i32
    %c0_i32_0 = arith.constant 0 : i32
    return %arg0, %c0_i32 : i32, i32
  }
  func.func @transform_1(%arg0: i32, %arg1: i32) -> (i32, i32) {
    %c0_i32 = arith.constant 0 : i32
    %c0_i32_0 = arith.constant 0 : i32
    return %arg1, %c0_i32 : i32, i32
  }
  func.func @transform_2(%arg0: i32, %arg1: i32) -> (i32, i32) {
    %c0_i32 = arith.constant 0 : i32
    %c0_i32_0 = arith.constant 0 : i32
    return %c0_i32, %arg1 : i32, i32
  }
  func.func @transform_3(%arg0: i32, %arg1: i32) -> (i32, i32) {
    %c0_i32 = arith.constant 0 : i32
    return %arg0, %arg1 : i32, i32
  }
}

</mosaic_0001>

<llo_original>
// kernel: tpu_custom_call.1
$region0: #{tpu_custom_call.1}
  #allocation0 [shape = 'u32[]', space=smem, size = 0x4, offset = 0x4, fixed_abs, tag = 'smem constant byte address 0x4 - core index']
  #allocation1 [shape = 'u32[144,128]{1,0:T(1,128)}', space=vmem, size = 0x12000, scoped, tag = 'internal scratch']
  %s0 = inlined_call_operand.hbm [shape: f32[8,256], index: 0, kind: input, shape index: {}]
  %s1 = inlined_call_operand.hbm [shape: f32[256,256], index: 1, kind: input, shape index: {}]
  %s2 = inlined_call_operand.vmem [shape: f32[1,256], index: 2, kind: input, shape index: {}]
  %s3 = inlined_call_operand.hbm [shape: f32[8,256], index: 3, kind: output, shape index: {}]
  %s4 = sld [smem:[#allocation0]]
  $region53: #{tpu_custom_call.1} parent=0
    _
  %s6 = ssub.s32 1, %s4
  %s7 = scalar_select 0, %s6, %s4
  $region1: #{tpu_custom_call.1} parent=0
    #allocation2 [shape = 'u8[8192]{0}', space=vmem, size = 0x2000, scoped, tag = 'input window, operand 0, single buffered']
    #allocation3 [shape = 's32[2]{0}', space=sflag, size = 0x8, scoped, tag = 'scoped memory for tpu_custom_call.1']
    #allocation4 [shape = 's32[2]{0}', space=sflag, size = 0x8, scoped, tag = 'scoped memory for tpu_custom_call.1']
    #allocation5 [shape = 'u8[262144]{0}', space=vmem, size = 0x40000, scoped, tag = 'input window, operand 1']
    #allocation6 [shape = 's32[2]{0}', space=sflag, size = 0x8, scoped, tag = 'scoped memory for tpu_custom_call.1']
    #allocation7 [shape = 'u8[8192]{0}', space=vmem, size = 0x2000, scoped, tag = 'output window, operand 0']
    %8 = vsyncpa [#allocation3], 0
    %9 = vsyncpa [#allocation6], 0
    %s10 = scalar_lea.sflag [#allocation6], 1
    %11 = vsyncpa %s10, 0
    %12 = vsyncpa [#allocation4], 0
    %s13 = scalar_lea.sflag [#allocation4], 1
    %14 = vsyncpa %s13, 0
    loop: start=0, step=1, limit=4
    $region2: #{tpu_custom_call.1} parent=1 // loop_pre_header
      _
    $region3: #{tpu_custom_call.1} parent=1 // loop_header
      %s16 = sphi 0, %s20
      %p17 = scmp.ge.s32.totalorder %s16, 4
      %s23 = sphi 0, %s35
      %s24 = sphi 0, %s31
      %s25 = sphi 0, %s23
      %s26 = sphi 0, %s24
      %s27 = sphi 0, %s25
      %s28 = sphi 0, %s26
      %s38 = sphi 0, %s40
      %s41 = sphi 0, %s38
      %s42 = sphi 0, %s41
      %s58 = sphi 0, %s42
      %s64 = sphi 0, %s66
      %s67 = sphi 0, %s64
      %s68 = sphi 0, %s67
      %s84 = sphi 0, %s68
      %s90 = sphi 0, %s92
      %s93 = sphi 0, %s90
      %s94 = sphi 0, %s93
      %s110 = sphi 0, %s94
      %s118 = sphi 0, %s120
      %s121 = sphi 0, %s118
      %s122 = sphi 0, %s121
      %s138 = sphi 0, %s122
    $region4: #{tpu_custom_call.1} parent=1 // loop_header_branch
      %19 = sbr.rel (%p17) target = $region8
    $region5: #{tpu_custom_call.1} parent=1 // loop_body
      %s21 = ssub.s32 %s16, 1
      %s22 = ssub.s32 %s16, 2
      %s29 = sadd.s32 1, %s24
      %p30 = scmp.ge.s32.totalorder %s29, 2
      %s31 = scalar_select %p30, 0, %s29
      %s32 = sadd.s32 1, %s23
      %s33 = scalar_select %p30, %s32, %s23
      %p34 = scmp.ge.s32.totalorder %s33, 1
      %s35 = scalar_select %p34, 0, %s33
      %s36 = ssub.s32 %s23, %s35
      %p37 = scmp.eq.s32.totalorder %s36, 0
      %s39 = sadd.s32 %s38, 1
      %s40 = scalar_select %p37, %s38, %s39
      %p43 = pneg %p37
      %p44 = scmp.eq.s32.totalorder %s16, 1
      %p45 = por %p43, %p44
      %p46 = scmp.ne.s32.totalorder %s38, %s41
      %p47 = scmp.eq.s32.totalorder %s16, 0
      %p48 = por %p46, %p47
      %p49 = scmp.ne.s32.totalorder %s38, %s41
      %p50 = scmp.eq.s32.totalorder %s21, 1
      %p51 = por %p49, %p50
      %p52 = scmp.ne.s32.totalorder %s41, %s42
      %p53 = scmp.eq.s32.totalorder %s21, 0
      %p54 = por %p52, %p53
      %p55 = scmp.ne.s32.totalorder %s41, %s42
      %p56 = scmp.eq.s32.totalorder %s22, 1
      %p57 = por %p55, %p56
      %p59 = scmp.ne.s32.totalorder %s42, %s58
      %p60 = scmp.eq.s32.totalorder %s22, 0
      %p61 = por %p59, %p60
      %s62 = ssub.s32 %s24, %s31
      %p63 = scmp.eq.s32.totalorder %s62, 0
      %s65 = sadd.s32 %s64, 1
      %s66 = scalar_select %p63, %s64, %s65
      %p69 = pneg %p63
      %p70 = scmp.eq.s32.totalorder %s16, 1
      %p71 = por %p69, %p70
      %p72 = scmp.ne.s32.totalorder %s64, %s67
      %p73 = scmp.eq.s32.totalorder %s16, 0
      %p74 = por %p72, %p73
      %p75 = scmp.ne.s32.totalorder %s64, %s67
      %p76 = scmp.eq.s32.totalorder %s21, 1
      %p77 = por %p75, %p76
      %p78 = scmp.ne.s32.totalorder %s67, %s68
      %p79 = scmp.eq.s32.totalorder %s21, 0
      %p80 = por %p78, %p79
      %p81 = scmp.ne.s32.totalorder %s67, %s68
      %p82 = scmp.eq.s32.totalorder %s22, 1
      %p83 = por %p81, %p82
      %p85 = scmp.ne.s32.totalorder %s68, %s84
      %p86 = scmp.eq.s32.totalorder %s22, 0
      %p87 = por %p85, %p86
      %s88 = ssub.s32 %s24, %s31
      %p89 = scmp.eq.s32.totalorder %s88, 0
      %s91 = sadd.s32 %s90, 1
      %s92 = scalar_select %p89, %s90, %s91
      %p95 = pneg %p89
      %p96 = scmp.eq.s32.totalorder %s16, 1
      %p97 = por %p95, %p96
      %p98 = scmp.ne.s32.totalorder %s90, %s93
      %p99 = scmp.eq.s32.totalorder %s16, 0
      %p100 = por %p98, %p99
      %p101 = scmp.ne.s32.totalorder %s90, %s93
      %p102 = scmp.eq.s32.totalorder %s21, 1
      %p103 = por %p101, %p102
      %p104 = scmp.ne.s32.totalorder %s93, %s94
      %p105 = scmp.eq.s32.totalorder %s21, 0
      %p106 = por %p104, %p105
      %p107 = scmp.ne.s32.totalorder %s93, %s94
      %p108 = scmp.eq.s32.totalorder %s22, 1
      %p109 = por %p107, %p108
      %p111 = scmp.ne.s32.totalorder %s94, %s110
      %p112 = scmp.eq.s32.totalorder %s22, 0
      %p113 = por %p111, %p112
      %s114 = ssub.s32 %s23, %s35
      %s115 = ssub.s32 %s24, %s31
      %s116 = sor.u32 %s114, %s115
      %p117 = scmp.eq.s32.totalorder %s116, 0
      %s119 = sadd.s32 %s118, 1
      %s120 = scalar_select %p117, %s118, %s119
      %p123 = pneg %p117
      %p124 = scmp.eq.s32.totalorder %s16, 1
      %p125 = por %p123, %p124
      %p126 = scmp.ne.s32.totalorder %s118, %s121
      %p127 = scmp.eq.s32.totalorder %s16, 0
      %p128 = por %p126, %p127
      %p129 = scmp.ne.s32.totalorder %s118, %s121
      %p130 = scmp.eq.s32.totalorder %s21, 1
      %p131 = por %p129, %p130
      %p132 = scmp.ne.s32.totalorder %s121, %s122
      %p133 = scmp.eq.s32.totalorder %s21, 0
      %p134 = por %p132, %p133
      %p135 = scmp.ne.s32.totalorder %s121, %s122
      %p136 = scmp.eq.s32.totalorder %s22, 1
      %p137 = por %p135, %p136
      %p139 = scmp.ne.s32.totalorder %s122, %s138
      %p140 = scmp.eq.s32.totalorder %s22, 0
      %p141 = por %p139, %p140
      %p142 = scmp.le.s32.totalorder 1, %s16
      %p143 = scmp.lt.s32.totalorder %s16, 3
      %p144 = pnand %p142, %p143
      %p145 = pneg %p144
      // Predicated region
      $region9: #{tpu_custom_call.1} parent=5 // pred_check
        _
      $region10: #{tpu_custom_call.1} parent=5 // pred_check_branch
        %147 = sbr.rel (%p144) target = $region12
      $region11: #{tpu_custom_call.1} parent=5 // pred_region
        %s148 = ssub.s32 %s16, 1
        // Predicated region
        $region13: #{tpu_custom_call.1} parent=11 // pred_check
          %p149 = pneg %p54
        $region14: #{tpu_custom_call.1} parent=11 // pred_check_branch
          %151 = sbr.rel (%p149) target = $region16
        $region15: #{tpu_custom_call.1} parent=11 // pred_region
          %s153 = ssub.s32 256, 256
          %154 = vsyncadd [#allocation3], %s153
          %s155 = smul.addr %s25, 2
          %s156 = smul.addr %s155, 128
          %s157 = scalar_lea.hbm %s0, %s156
          %s159 = sshll.u32 [#allocation2], 4
          %s160 = int_to_ptr.vmem [resolvable:$true] %s159
          %162 = dma.hbm_to_vmem [thread:$0]  %s157, 256, %s160, [#allocation3]
        $region16: #{tpu_custom_call.1} parent=11 // pred_fallthru
          _
      $region12: #{tpu_custom_call.1} parent=5 // pred_fallthru
        _
      %p163 = scmp.lt.s32.totalorder %s16, 2
      // Predicated region
      $region17: #{tpu_custom_call.1} parent=5 // pred_check
        %p164 = pneg %p163
      $region18: #{tpu_custom_call.1} parent=5 // pred_check_branch
        %166 = sbr.rel (%p164) target = $region20
      $region19: #{tpu_custom_call.1} parent=5 // pred_region
        // Predicated region
        $region21: #{tpu_custom_call.1} parent=19 // pred_check
          %p167 = pneg %p74
        $region22: #{tpu_custom_call.1} parent=19 // pred_check_branch
          %169 = sbr.rel (%p167) target = $region24
        $region23: #{tpu_custom_call.1} parent=19 // pred_region
          %s170 = sand.u32 %s64, 1
          %s171 = scalar_lea.sflag [#allocation6], %s170
          %s172 = sand.u32 %s64, 1
          %s173 = smul.addr %s172, 256
          %s174 = scalar_lea.vmem [#allocation5], %s173
          %s175 = smul.u32 16, %s24
          %s177 = ssub.s32 4096, 4096
          %178 = vsyncadd %s171, %s177
          %s179 = smul.addr %s175, 2
          %s180 = smul.addr %s179, 128
          %s181 = scalar_lea.hbm %s1, %s180
          %s182 = sshll.u32 %s174, 4
          %s183 = int_to_ptr.vmem [resolvable:$true] %s182
          %188 = dma.hbm_to_vmem [thread:$0]  %s181, 4096, %s183, %s171, 256, 256, 16
        $region24: #{tpu_custom_call.1} parent=19 // pred_fallthru
          _
        // Predicated region
        $region25: #{tpu_custom_call.1} parent=19 // pred_check
          %p189 = pneg %p100
        $region26: #{tpu_custom_call.1} parent=19 // pred_check_branch
          %191 = sbr.rel (%p189) target = $region28
        $region27: #{tpu_custom_call.1} parent=19 // pred_region
          %p192 = scmp.lt.s32.totalorder %s24, 1
          %s193 = scalar_select %p192, %s24, 1
          %s194 = scalar_lea.vmem %s2, %s193
        $region28: #{tpu_custom_call.1} parent=19 // pred_fallthru
          _
      $region20: #{tpu_custom_call.1} parent=5 // pred_fallthru
        _
      %p195 = scmp.le.s32.totalorder 1, %s16
      %p196 = scmp.lt.s32.totalorder %s16, 3
      %p197 = pnand %p195, %p196
      %p198 = pneg %p197
      // Predicated region
      $region29: #{tpu_custom_call.1} parent=5 // pred_check
        _
      $region30: #{tpu_custom_call.1} parent=5 // pred_check_branch
        %200 = sbr.rel (%p197) target = $region32
      $region31: #{tpu_custom_call.1} parent=5 // pred_region
        %s201 = ssub.s32 %s16, 1
        // Predicated region
        $region33: #{tpu_custom_call.1} parent=31 // pred_check
          %p202 = pneg %p54
        $region34: #{tpu_custom_call.1} parent=31 // pred_check_branch
          %204 = sbr.rel (%p202) target = $region36
        $region35: #{tpu_custom_call.1} parent=31 // pred_region
          %205 = dma.done [#allocation3], 256
        $region36: #{tpu_custom_call.1} parent=31 // pred_fallthru
          _
        %s206 = sand.u32 %s67, 1
        %s207 = scalar_lea.sflag [#allocation6], %s206
        %s208 = sand.u32 %s67, 1
        %s209 = smul.addr %s208, 256
        %s210 = scalar_lea.vmem [#allocation5], %s209
        // Predicated region
        $region37: #{tpu_custom_call.1} parent=31 // pred_check
          %p211 = pneg %p80
        $region38: #{tpu_custom_call.1} parent=31 // pred_check_branch
          %213 = sbr.rel (%p211) target = $region40
        $region39: #{tpu_custom_call.1} parent=31 // pred_region
          %214 = dma.done %s207, 4096
        $region40: #{tpu_custom_call.1} parent=31 // pred_fallthru
          _
        %p215 = pneg %p54
        %p216 = pneg %p51
        %s217 = sand.u32 %s67, 1
        %s218 = scalar_lea.sflag [#allocation6], %s217
        %s219 = sand.u32 %s67, 1
        %s220 = smul.addr %s219, 256
        %s221 = scalar_lea.vmem [#allocation5], %s220
        %p222 = pneg %p80
        %p223 = pneg %p77
        %p224 = scmp.lt.s32.totalorder %s26, 1
        %s225 = scalar_select %p224, %s26, 1
        %s226 = scalar_lea.vmem %s2, %s225
        %p227 = pneg %p106
        %p228 = pneg %p103
        %p229 = pneg %p134
        %p230 = pneg %p131
        %s231 = sand.u32 %s121, 1
        %s232 = scalar_lea.sflag [#allocation4], %s231
        %s233 = sand.u32 %s121, 1
        %s234 = smul.addr %s233, 8
        %s235 = scalar_lea.vmem [#allocation7], %s234
        %s236 = smul.u32 16, %s26
        %p237 = scmp.lt.s32.totalorder %s26, 1
        %s238 = scalar_select %p237, %s26, 1
        %s239 = scalar_lea.vmem %s2, %s238
        %v240 = vld [vmem:[#allocation2] sm:$0xff]
        %v241 = vld [vmem:[#allocation2 + $0x8] sm:$0xff]
        %v242 = vld [vmem:[%s210] sm:$0xff]
        %v243 = vld [vmem:[%s210 + $0x8] sm:$0xff]
        %v244 = vld [vmem:[%s210 + $0x10] sm:$0xff]
        %v245 = vld [vmem:[%s210 + $0x18] sm:$0xff]
        %v246 = vld [vmem:[%s210 + $0x20] sm:$0xff]
        %v247 = vld [vmem:[%s210 + $0x28] sm:$0xff]
        %v248 = vld [vmem:[%s210 + $0x30] sm:$0xff]
        %v249 = vld [vmem:[%s210 + $0x38] sm:$0xff]
        %v250 = vld [vmem:[%s210 + $0x40] sm:$0xff]
        %v251 = vld [vmem:[%s210 + $0x48] sm:$0xff]
        %v252 = vld [vmem:[%s210 + $0x50] sm:$0xff]
        %v253 = vld [vmem:[%s210 + $0x58] sm:$0xff]
        %v254 = vld [vmem:[%s210 + $0x60] sm:$0xff]
        %v255 = vld [vmem:[%s210 + $0x68] sm:$0xff]
        %v256 = vld [vmem:[%s210 + $0x70] sm:$0xff]
        %v257 = vld [vmem:[%s210 + $0x78] sm:$0xff]
        %v258 = vld [vmem:[%s210 + $0x80] sm:$0xff]
        %v259 = vld [vmem:[%s210 + $0x88] sm:$0xff]
        %v260 = vld [vmem:[%s210 + $0x90] sm:$0xff]
        %v261 = vld [vmem:[%s210 + $0x98] sm:$0xff]
        %v262 = vld [vmem:[%s210 + $0xa0] sm:$0xff]
        %v263 = vld [vmem:[%s210 + $0xa8] sm:$0xff]
        %v264 = vld [vmem:[%s210 + $0xb0] sm:$0xff]
        %v265 = vld [vmem:[%s210 + $0xb8] sm:$0xff]
        %v266 = vld [vmem:[%s210 + $0xc0] sm:$0xff]
        %v267 = vld [vmem:[%s210 + $0xc8] sm:$0xff]
        %v268 = vld [vmem:[%s210 + $0xd0] sm:$0xff]
        %v269 = vld [vmem:[%s210 + $0xd8] sm:$0xff]
        %v270 = vld [vmem:[%s210 + $0xe0] sm:$0xff]
        %v271 = vld [vmem:[%s210 + $0xe8] sm:$0xff]
        %v272 = vld [vmem:[%s210 + $0xf0] sm:$0xff]
        %v273 = vld [vmem:[%s210 + $0xf8] sm:$0xff]
        %274 = vmatprep.subr.mxu0 %v243
        %275 = vmatpush1.xpose.msra.mxu0 %v242
        %276 = vmatprep.subr.mxu0 %v245
        %277 = vmatpush1.xpose.msra.mxu0 %v244
        %278 = vmatprep.subr.mxu0 %v247
        %279 = vmatpush1.xpose.msra.mxu0 %v246
        %280 = vmatprep.subr.mxu0 %v249
        %281 = vmatpush1.xpose.msra.mxu0 %v248
        %282 = vmatprep.subr.mxu0 %v251
        %283 = vmatpush1.xpose.msra.mxu0 %v250
        %284 = vmatprep.subr.mxu0 %v253
        %285 = vmatpush1.xpose.msra.mxu0 %v252
        %286 = vmatprep.subr.mxu0 %v255
        %287 = vmatpush1.xpose.msra.mxu0 %v254
        %288 = vmatprep.subr.mxu0 %v257
        %289 = vmatpush1.xpose.msra.mxu0 %v256
        %290 = vmatprep.subr.mxu0 %v259
        %291 = vmatpush1.xpose.msra.mxu0 %v258
        %292 = vmatprep.subr.mxu0 %v261
        %293 = vmatpush1.xpose.msra.mxu0 %v260
        %294 = vmatprep.subr.mxu0 %v263
        %295 = vmatpush1.xpose.msra.mxu0 %v262
        %296 = vmatprep.subr.mxu0 %v265
        %297 = vmatpush1.xpose.msra.mxu0 %v264
        %298 = vmatprep.subr.mxu0 %v267
        %299 = vmatpush1.xpose.msra.mxu0 %v266
        %300 = vmatprep.subr.mxu0 %v269
        %301 = vmatpush1.xpose.msra.mxu0 %v268
        %302 = vmatprep.subr.mxu0 %v271
        %303 = vmatpush1.xpose.msra.mxu0 %v270
        %304 = vmatprep.subr.mxu0 %v273
        %305 = vmatpush1.xpose.msra.mxu0 %v272
        %306 = vmatprep.subr.mxu0 0.0
        %307 = vmatpush1.xpose.msra.mxu0 0.0
        %308 = vmatprep.subr.mxu0 0.0
        %309 = vmatpush1.xpose.msra.mxu0 0.0
        %310 = vmatprep.subr.mxu0 0.0
        %311 = vmatpush1.xpose.msra.mxu0 0.0
        %312 = vmatprep.subr.mxu0 0.0
        %313 = vmatpush1.xpose.msra.mxu0 0.0
        %314 = vmatprep.subr.mxu0 0.0
        %315 = vmatpush1.xpose.msra.mxu0 0.0
        %316 = vmatprep.subr.mxu0 0.0
        %317 = vmatpush1.xpose.msra.mxu0 0.0
        %318 = vmatprep.subr.mxu0 0.0
        %319 = vmatpush1.xpose.msra.mxu0 0.0
        %320 = vmatprep.subr.mxu0 0.0
        %321 = vmatpush1.xpose.msra.mxu0 0.0
        %322 = vmatprep.subr.mxu0 0.0
        %323 = vmatpush1.xpose.msra.mxu0 0.0
        %324 = vmatprep.subr.mxu0 0.0
        %325 = vmatpush1.xpose.msra.mxu0 0.0
        %326 = vmatprep.subr.mxu0 0.0
        %327 = vmatpush1.xpose.msra.mxu0 0.0
        %328 = vmatprep.subr.mxu0 0.0
        %329 = vmatpush1.xpose.msra.mxu0 0.0
        %330 = vmatprep.subr.mxu0 0.0
        %331 = vmatpush1.xpose.msra.mxu0 0.0
        %332 = vmatprep.subr.mxu0 0.0
        %333 = vmatpush1.xpose.msra.mxu0 0.0
        %334 = vmatprep.subr.mxu0 0.0
        %335 = vmatpush1.xpose.msra.mxu0 0.0
        %336 = vmatprep.subr.mxu0 0.0
        %337 = vmatpush1.xpose.msra.mxu0 0.0
        %338 = vmatprep.mubr.f32.mxu0 %v241
        %339 = vmatmul.mubr.f32.gmra.mrb[0].mxu0 %v240
        %v340 = vpop.f32.mrb[0].mxu0
        %v341 = vadd.f32 0.0, %v340
        %v342 = vpop.f32.mrb[0].mxu0
        %343 = vdwg.mxu0
        %v344 = vmul.f32 %v341, 0.088388346
        %v345 = vld [vmem:[%s239] sm:$0x1]
        %v347 = vlaneseq
        %v348 = vshrl.u32 %v347, 7
        %v349 = vsub.s32 0, %v348
        %v350 = vrot.slane %v345, %v349
        %v352 = vadd.f32 %v344, %v350
        %353 = vst [vmem:[%s235] sm:$0xff] %v352
        %s354 = sand.u32 %s121, 1
        %s355 = scalar_lea.sflag [#allocation4], %s354
        %s356 = sand.u32 %s121, 1
        %s357 = smul.addr %s356, 8
        %s358 = scalar_lea.vmem [#allocation7], %s357
        // Predicated region
        $region41: #{tpu_custom_call.1} parent=31 // pred_check
          %p359 = pneg %p131
        $region42: #{tpu_custom_call.1} parent=31 // pred_check_branch
          %361 = sbr.rel (%p359) target = $region44
        $region43: #{tpu_custom_call.1} parent=31 // pred_region
          %s363 = ssub.s32 128, 128
          %364 = vsyncadd %s355, %s363
          %s365 = smul.addr %s25, 2
          %s366 = sadd.s32 %s26, %s365
          %s367 = smul.addr %s366, 128
          %s368 = scalar_lea.hbm %s3, %s367
          %s370 = sshll.u32 %s358, 4
          %s371 = int_to_ptr.vmem [resolvable:$true] %s370
          %373 = dma.vmem_to_hbm [thread:$0]  %s371, 128, %s368, %s355
        $region44: #{tpu_custom_call.1} parent=31 // pred_fallthru
          _
      $region32: #{tpu_custom_call.1} parent=5 // pred_fallthru
        _
      %p374 = scmp.le.s32.totalorder 2, %s16
      // Predicated region
      $region45: #{tpu_custom_call.1} parent=5 // pred_check
        %p375 = pneg %p374
      $region46: #{tpu_custom_call.1} parent=5 // pred_check_branch
        %377 = sbr.rel (%p375) target = $region48
      $region47: #{tpu_custom_call.1} parent=5 // pred_region
        %s378 = ssub.s32 %s16, 2
        // Predicated region
        $region49: #{tpu_custom_call.1} parent=47 // pred_check
          %p379 = pneg %p137
        $region50: #{tpu_custom_call.1} parent=47 // pred_check_branch
          %381 = sbr.rel (%p379) target = $region52
        $region51: #{tpu_custom_call.1} parent=47 // pred_region
          %s382 = sand.u32 %s122, 1
          %s383 = scalar_lea.sflag [#allocation4], %s382
          %s384 = sand.u32 %s122, 1
          %s385 = smul.addr %s384, 8
          %s386 = scalar_lea.vmem [#allocation7], %s385
          %387 = dma.done %s383, 128
        $region52: #{tpu_custom_call.1} parent=47 // pred_fallthru
          _
      $region48: #{tpu_custom_call.1} parent=5 // pred_fallthru
        _
    $region6: #{tpu_custom_call.1} parent=1 // loop_footer
      %s20 = sadd.s32 1, %s16
    $region7: #{tpu_custom_call.1} parent=1 // loop_footer_branch
      %15 = sbr.rel target = $region3
    $region8: #{tpu_custom_call.1} parent=1 // loop_exit
      _
    %388 = vsyncpa [#allocation3], 1
    %s389 = scalar_lea.sflag [#allocation3], 1
    %390 = vsyncpa %s389, 1
    %391 = vsyncpa [#allocation6], 1
    %s392 = scalar_lea.sflag [#allocation6], 1
    %393 = vsyncpa %s392, 1
    %394 = vsyncpa [#allocation4], 1
    %s395 = scalar_lea.sflag [#allocation4], 1
    %396 = vsyncpa %s395, 1

</llo_original>
